<compile_context>
chip_gen: v7x
topology: tpu7x:2x2x1
jax: 0.10.0
libtpu: 0.0.40
codegen_flags: <defaults>
</compile_context>

<pallas_src>
import functools

import jax
import jax.numpy as jnp
from jax import lax
from jax.experimental import pallas as pl
from jax.experimental.pallas import tpu as pltpu


def _rmsnorm_kernel(x_ref, w_ref, o_ref, *, eps, add_unit_offset):
    # x_ref: (tile_rows, dim), w_ref: (1, dim), o_ref: (tile_rows, dim)
    x = x_ref[...].astype(jnp.float32)                      # x.float()
    ms = jnp.mean(x * x, axis=-1, keepdims=True)            # pow(2).mean(-1)
    y = x * lax.rsqrt(ms + eps)                             # * rsqrt(... + eps)
    y = y.astype(o_ref.dtype)                               # .type_as(x) rounding parity
    w = w_ref[...].astype(jnp.float32)
    scale = (1.0 + w) if add_unit_offset else w
    o_ref[...] = (y.astype(jnp.float32) * scale).astype(o_ref.dtype)


def _round_up(n, m):
    return ((n + m - 1) // m) * m


def _tpu_vmem_and_cores():
    """Best-effort (vmem_capacity_bytes, has_two_tensorcores) for this chip."""
    vmem_bytes = None
    try:
        info = pltpu.get_tpu_info()
        vmem_bytes = getattr(info, "vmem_capacity_bytes", None)
    except Exception:
        vmem_bytes = None
    kind = ""
    try:
        kind = jax.devices()[0].device_kind.lower()
    except Exception:
        kind = ""
    two_tc = "v7" in kind
    if vmem_bytes is None:
        vmem_bytes = (64 if two_tc else 128) * 1024 * 1024
    return int(vmem_bytes), two_tc


def _generation_budgets():
    """(tile_budget_bytes, vmem_limit_bytes, max_tile_rows, two_tc)."""
    vmem_bytes, two_tc = _tpu_vmem_and_cores()
    if vmem_bytes >= 100 * 1024 * 1024:
        # 128 MiB parts (v5e / v6e): big blocks, fewer step boundaries.
        return 56 * 1024 * 1024, 96 * 1024 * 1024, 2048, two_tc
    # 64 MiB parts (v7x): stay well clear of VMEM OOM / spill.
    return 26 * 1024 * 1024, 44 * 1024 * 1024, 1024, two_tc


def _pick_tile_rows(rows, dim, dtype, tile_budget_bytes, max_tile_rows):
    """Largest row tile (multiple of 8) fitting the budget, >= 4 grid steps
    when rows permit (with a 512-row floor so small tiles are never forced).

    Budget model: double-buffered (input block + output block) plus ~2
    full-tile f32 temporaries for the x.astype(float32) path.
    """
    itemsize = jnp.dtype(dtype).itemsize
    per_row_bytes = dim * (2 * (itemsize + itemsize) + 2 * 4)
    tile = tile_budget_bytes // max(per_row_bytes, 1)
    tile = max(8, min(max_tile_rows, tile))
    tile = max(8, (tile // 8) * 8)                 # sublane multiple
    rows_rounded = _round_up(rows, 8)
    tile = min(tile, rows_rounded)                 # don't over-allocate
    if rows_rounded > tile:
        # Aim for >= 4 grid steps (amortizes pipeline fill/drain, even 2-way
        # split on v7x), but never force tiles below 512 rows just for steps.
        steps_target = max(512, _round_up(-(-rows // 4), 8))
        tile = min(tile, max(8, steps_target))
    return tile


def rmsnorm(x, weight, *, eps=1e-6, add_unit_offset=True, tile_rows=None):
    """RMSNorm over the last axis of x, scaled by (1 + weight) (or weight)."""
    dim = x.shape[-1]
    assert weight.shape == (dim,)
    lead_shape = x.shape[:-1]
    rows = 1
    for s in lead_shape:
        rows *= s
    x2d = x.reshape(rows, dim)
    w2d = weight.reshape(1, dim)

    tile_budget, vmem_limit, max_tile_rows, two_tc = _generation_budgets()
    if tile_rows is None:
        tile_rows = _pick_tile_rows(rows, dim, x.dtype, tile_budget, max_tile_rows)
    else:
        tile_rows = max(8, (int(tile_rows) // 8) * 8)

    num_steps = pl.cdiv(rows, tile_rows)           # last block may be partial
    grid = (num_steps,)

    # On 2-TC chips (v7x) explicitly shard the row axis across TensorCores;
    # fall back to plain "parallel" when the step count doesn't split evenly.
    if two_tc and num_steps >= 2 and num_steps % 2 == 0:
        dims = (getattr(pltpu, "CORE_PARALLEL", "parallel"),)
    else:
        dims = ("parallel",)

    kernel = functools.partial(
        _rmsnorm_kernel, eps=eps, add_unit_offset=add_unit_offset
    )
    out2d = pl.pallas_call(
        kernel,
        out_shape=jax.ShapeDtypeStruct((rows, dim), x.dtype),
        grid_spec=pltpu.PrefetchScalarGridSpec(
            num_scalar_prefetch=0,
            grid=grid,
            in_specs=[
                pl.BlockSpec((tile_rows, dim), lambda i: (i, 0)),
                pl.BlockSpec((1, dim), lambda i: (0, 0)),
            ],
            out_specs=pl.BlockSpec((tile_rows, dim), lambda i: (i, 0)),
        ),
        compiler_params=pltpu.CompilerParams(
            dimension_semantics=dims,
            vmem_limit_bytes=vmem_limit,
        ),
    )(x2d, w2d)

    return out2d.reshape(*lead_shape, dim)


def _rmsnorm_ref(x, weight, eps=1e-6, add_unit_offset=True):
    xf = x.astype(jnp.float32)
    y = xf * lax.rsqrt(jnp.mean(xf * xf, axis=-1, keepdims=True) + eps)
    y = y.astype(x.dtype)
    scale = (1.0 + weight) if add_unit_offset else weight
    return (y * scale).astype(x.dtype)


if __name__ == "__main__":
    key = jax.random.PRNGKey(0)

    # Case 1: divisible row count (batch=2, seq=8, dim=32).
    # Note: dim=32 (<128) means lane utilization is 32/128 and stores are
    # masked; this is fine for a smoke test, production dims >= 1024 are
    # lane-dense.
    batch, seq, dim = 2, 8, 32
    x = jax.random.normal(key, (batch, seq, dim), dtype=jnp.float32)
    # Module inits weight to ones; add a tiny deterministic perturbation.
    weight = jnp.ones((dim,), dtype=jnp.float32) + 0.01 * jnp.arange(
        dim, dtype=jnp.float32
    )

    out = rmsnorm(x, weight, eps=1e-6, add_unit_offset=True)
    out = jax.block_until_ready(out)
    ref = _rmsnorm_ref(x, weight, eps=1e-6, add_unit_offset=True)
    assert out.shape == x.shape and out.dtype == x.dtype
    assert jnp.allclose(out, ref, atol=1e-5, rtol=1e-5)

    # Case 2: ragged row count (exercises the partial final block; the last
    # valid row must match the reference exactly, OOB rows are discarded).
    key2 = jax.random.PRNGKey(1)
    x2 = jax.random.normal(key2, (3, 5, dim), dtype=jnp.float32)
    out2 = jax.block_until_ready(
        rmsnorm(x2, weight, eps=1e-6, add_unit_offset=True)
    )
    ref2 = _rmsnorm_ref(x2, weight, eps=1e-6, add_unit_offset=True)
    assert out2.shape == x2.shape and out2.dtype == x2.dtype
    assert jnp.allclose(out2, ref2, atol=1e-5, rtol=1e-5)
    assert jnp.allclose(out2[-1, -1], ref2[-1, -1], atol=1e-5, rtol=1e-5)

    # add_unit_offset=False branch.
    out3 = jax.block_until_ready(
        rmsnorm(x, weight, eps=1e-6, add_unit_offset=False)
    )
    ref3 = _rmsnorm_ref(x, weight, eps=1e-6, add_unit_offset=False)
    assert jnp.allclose(out3, ref3, atol=1e-5, rtol=1e-5)

    print("KERNEL_OK")
</pallas_src>

<mosaic_0001>
module attributes {stable_mosaic.version = 11 : i64} {
  func.func @_rmsnorm_kernel(%arg0: i32, %arg1: memref<16x32xf32, #tpu.memory_space<vmem>>, %arg2: memref<1x32xf32, #tpu.memory_space<vmem>>, %arg3: memref<16x32xf32, #tpu.memory_space<vmem>>) attributes {dimension_semantics = [#tpu.dimension_semantics<parallel>], iteration_bounds = array<i64: 1>, scalar_prefetch = 0 : i64, scratch_operands = 0 : i64, tpu.core_type = #tpu.core_type<tc>, window_params = [{transform_indices = @transform_0, window_bounds = array<i64: 16, 32>}, {pipeline_mode = #tpu.pipeline_mode<synchronous>, transform_indices = @transform_1, window_bounds = array<i64: 1, 32>}, {transform_indices = @transform_2, window_bounds = array<i64: 16, 32>}]} {
    %c0 = arith.constant 0 : index
    %c0_0 = arith.constant 0 : index
    %0 = vector.load %arg1[%c0, %c0_0] : memref<16x32xf32, #tpu.memory_space<vmem>>, vector<16x32xf32>
    %1 = arith.mulf %0, %0 : vector<16x32xf32>
    %cst = arith.constant dense<0.000000e+00> : vector<16xf32>
    %2 = vector.multi_reduction <add>, %1, %cst [1] : vector<16x32xf32> to vector<16xf32>
    %3 = vector.shape_cast %2 : vector<16xf32> to vector<16x1xf32>
    %cst_1 = arith.constant 3.200000e+01 : f32
    %4 = vector.broadcast %cst_1 : f32 to vector<16x1xf32>
    %5 = arith.divf %3, %4 : vector<16x1xf32>
    %cst_2 = arith.constant 9.99999997E-7 : f32
    %6 = vector.broadcast %cst_2 : f32 to vector<16x1xf32>
    %7 = arith.addf %5, %6 : vector<16x1xf32>
    %8 = math.rsqrt %7 : vector<16x1xf32>
    %9 = vector.broadcast %8 : vector<16x1xf32> to vector<16x32xf32>
    %10 = arith.mulf %0, %9 : vector<16x32xf32>
    %c0_3 = arith.constant 0 : index
    %c0_4 = arith.constant 0 : index
    %11 = vector.load %arg2[%c0_3, %c0_4] : memref<1x32xf32, #tpu.memory_space<vmem>>, vector<1x32xf32>
    %cst_5 = arith.constant 1.000000e+00 : f32
    %12 = vector.broadcast %cst_5 : f32 to vector<1x32xf32>
    %13 = arith.addf %12, %11 : vector<1x32xf32>
    %14 = vector.broadcast %13 : vector<1x32xf32> to vector<16x32xf32>
    %15 = arith.mulf %10, %14 : vector<16x32xf32>
    %c0_6 = arith.constant 0 : index
    %c0_7 = arith.constant 0 : index
    %16 = vector.load %arg3[%c0_6, %c0_7] : memref<16x32xf32, #tpu.memory_space<vmem>>, vector<16x32xf32>
    tpu.vector_store %arg3[%c0_6, %c0_7], %15 {strides = array<i32>} : memref<16x32xf32, #tpu.memory_space<vmem>>, vector<16x32xf32>,
    return
  }
  func.func @transform_0(%arg0: i32) -> (i32, i32) {
    %c0_i32 = arith.constant 0 : i32
    %c0_i32_0 = arith.constant 0 : i32
    return %arg0, %c0_i32 : i32, i32
  }
  func.func @transform_1(%arg0: i32) -> (i32, i32) {
    %c0_i32 = arith.constant 0 : i32
    %c0_i32_0 = arith.constant 0 : i32
    %c0_i32_1 = arith.constant 0 : i32
    return %c0_i32, %c0_i32_0 : i32, i32
  }
  func.func @transform_2(%arg0: i32) -> (i32, i32) {
    %c0_i32 = arith.constant 0 : i32
    %c0_i32_0 = arith.constant 0 : i32
    return %arg0, %c0_i32 : i32, i32
  }
}

</mosaic_0001>

<llo_original>
// kernel: tpu_custom_call.1
$region0: #{tpu_custom_call.1}
  #allocation0 [shape = 'u32[]', space=smem, size = 0x4, offset = 0x4, fixed_abs, tag = 'smem constant byte address 0x4 - core index']
  #allocation1 [shape = 'u32[144,128]{1,0:T(1,128)}', space=vmem, size = 0x12000, scoped, tag = 'internal scratch']
  %s0 = inlined_call_operand.hbm [shape: f32[16,32], index: 0, kind: input, shape index: {}]
  %s1 = inlined_call_operand.hbm [shape: f32[1,32], index: 1, kind: input, shape index: {}]
  %s2 = inlined_call_operand.hbm [shape: f32[16,32], index: 2, kind: output, shape index: {}]
  %s3 = sld [smem:[#allocation0]]
  $region26: #{tpu_custom_call.1} parent=0
    _
  %s5 = ssub.s32 1, %s3
  %s6 = scalar_select 0, %s5, %s3
  $region1: #{tpu_custom_call.1} parent=0
    #allocation2 [shape = 'u8[8192]{0}', space=vmem, size = 0x2000, scoped, tag = 'input window, operand 0, single buffered']
    #allocation3 [shape = 's32[1]{0}', space=sflag, size = 0x4, scoped, tag = 'scoped memory for tpu_custom_call.1']
    #allocation4 [shape = 's32[1]{0}', space=sflag, size = 0x4, scoped, tag = 'scoped memory for tpu_custom_call.1']
    #allocation5 [shape = 'u8[512]{0}', space=vmem, size = 0x400, scoped, tag = 'input window, operand 1, single buffered']
    #allocation6 [shape = 's32[1]{0}', space=sflag, size = 0x4, scoped, tag = 'scoped memory for tpu_custom_call.1']
    #allocation7 [shape = 'u8[8192]{0}', space=vmem, size = 0x2000, scoped, tag = 'output window, operand 0, single buffered']
    %7 = vsyncpa [#allocation3], 0
    %8 = vsyncpa [#allocation6], 0
    %9 = vsyncpa [#allocation4], 0
    // Predicated region
    $region2: #{tpu_custom_call.1} parent=1 // pred_check
      _
    $region3: #{tpu_custom_call.1} parent=1 // pred_check_branch
      %11 = sbr.rel (0) target = $region5
    $region4: #{tpu_custom_call.1} parent=1 // pred_region
      %s13 = ssub.s32 256, 256
      %14 = vsyncadd [#allocation3], %s13
      %s15 = sshll.u32 [#allocation2], 4
      %s16 = int_to_ptr.vmem [resolvable:$true] %s15
      %21 = dma.hbm_to_vmem [thread:$0]  %s0, 256, %s16, [#allocation3], 128, 128, 8
    $region5: #{tpu_custom_call.1} parent=1 // pred_fallthru
      _
    // Predicated region
    $region6: #{tpu_custom_call.1} parent=1 // pred_check
      _
    $region7: #{tpu_custom_call.1} parent=1 // pred_check_branch
      %23 = sbr.rel (0) target = $region9
    $region8: #{tpu_custom_call.1} parent=1 // pred_region
      %s25 = ssub.s32 16, 16
      %26 = vsyncadd [#allocation6], %s25
      %s28 = sshll.u32 [#allocation5], 4
      %s29 = int_to_ptr.vmem [resolvable:$true] %s28
      %31 = dma.hbm_to_vmem [thread:$0]  %s1, 16, %s29, [#allocation6]
    $region9: #{tpu_custom_call.1} parent=1 // pred_fallthru
      _
    // Predicated region
    $region10: #{tpu_custom_call.1} parent=1 // pred_check
      _
    $region11: #{tpu_custom_call.1} parent=1 // pred_check_branch
      %33 = sbr.rel (0) target = $region13
    $region12: #{tpu_custom_call.1} parent=1 // pred_region
      %34 = dma.done [#allocation3], 256
    $region13: #{tpu_custom_call.1} parent=1 // pred_fallthru
      _
    // Predicated region
    $region14: #{tpu_custom_call.1} parent=1 // pred_check
      _
    $region15: #{tpu_custom_call.1} parent=1 // pred_check_branch
      %36 = sbr.rel (0) target = $region17
    $region16: #{tpu_custom_call.1} parent=1 // pred_region
      %37 = dma.done [#allocation6], 16
    $region17: #{tpu_custom_call.1} parent=1 // pred_fallthru
      _
    %v38 = vld [vmem:[#allocation2] sm:$0xff]
    %v39 = vld [vmem:[#allocation2 + $0x8] sm:$0xff]
    %v40 = vmul.f32 %v38, %v38
    %v41 = vmul.f32 %v39, %v39
    %vm42 = vcmask 261120
    %v43 = vsel %vm42, %v40, 0.0
    %44 = vadd.xlane.f32.xlu0 %v43
    %v45 = vpop.xlane.xlu0 %44
    %v46 = vsel %vm42, %v41, 0.0
    %47 = vadd.xlane.f32.xlu0 %v46
    %v48 = vpop.xlane.xlu0 %47
    %v49 = vrcp.pop 32.0
    %v50 = vmul.f32 %v45, %v49
    %v51 = vmul.f32 %v48, %v49
    %v52 = vadd.f32 %v50, 1e-06
    %v53 = vadd.f32 %v51, 1e-06
    %v54 = vrsqrt.pop %v52
    %v55 = vrsqrt.pop %v53
    %v56 = vmul.f32 %v38, %v54
    %v57 = vmul.f32 %v39, %v55
    %v58 = vld [vmem:[#allocation5] sm:$0x1]
    %v59 = vadd.f32 %v58, 1.0
    %v61 = vlaneseq
    %v62 = vshrl.u32 %v61, 7
    %v63 = vsub.s32 0, %v62
    %v64 = vrot.slane %v59, %v63
    %v66 = vmul.f32 %v56, %v64
    %v67 = vmul.f32 %v57, %v64
    %68 = vst.msk [vmem:[#allocation7] sm:$0xff] %vm42, %v66
    %69 = vst.msk [vmem:[#allocation7 + $0x8] sm:$0xff] %vm42, %v67
    // Predicated region
    $region18: #{tpu_custom_call.1} parent=1 // pred_check
      _
    $region19: #{tpu_custom_call.1} parent=1 // pred_check_branch
      %71 = sbr.rel (0) target = $region21
    $region20: #{tpu_custom_call.1} parent=1 // pred_region
      %s73 = ssub.s32 256, 256
      %74 = vsyncadd [#allocation4], %s73
      %s75 = sshll.u32 [#allocation7], 4
      %s76 = int_to_ptr.vmem [resolvable:$true] %s75
      %81 = dma.vmem_to_hbm [thread:$0]  %s76, 256, %s2, [#allocation4], 128, 128, 8
    $region21: #{tpu_custom_call.1} parent=1 // pred_fallthru
      _
    // Predicated region
    $region22: #{tpu_custom_call.1} parent=1 // pred_check
      _
    $region23: #{tpu_custom_call.1} parent=1 // pred_check_branch
      %83 = sbr.rel (0) target = $region25
    $region24: #{tpu_custom_call.1} parent=1 // pred_region
      %84 = dma.done [#allocation4], 256
    $region25: #{tpu_custom_call.1} parent=1 // pred_fallthru
      _
    %85 = vsyncpa [#allocation3], 1
    %86 = vsyncpa [#allocation6], 1
    %87 = vsyncpa [#allocation4], 1

</llo_original>
